<compile_context>
chip_gen: v5e
topology: v5e:2x2
jax: 0.10.0
libtpu: 0.0.40
codegen_flags: <defaults>
</compile_context>

<pallas_src>
import math

import jax
import jax.numpy as jnp
from jax.experimental import pallas as pl
from jax.experimental.pallas import tpu as pltpu

_EXP_HALF_PI = math.exp(math.pi / 2.0)  # same constant as the torch reference

_LANES_MAX = 1024                # widest lane collapse we search for (mult of 128)
_TARGET_BLOCK_ELEMS = 1 << 20    # ~4 MiB f32 per block; in+out double-buffered = 16 MiB


def _round_up(v, m):
    return -(-v // m) * m


def _aarelu_kernel(alpha_ref, x_ref, o_ref):
    # alpha_ref: (1, 1) f32 scalar parameter in SMEM.
    a = jnp.maximum(alpha_ref[0, 0], 1e-6)
    inv_a = 1.0 / a                      # scalar reciprocal, hoisted
    cutoff = a * _EXP_HALF_PI

    # Compute in f32 regardless of input dtype (bf16-safe transcendentals;
    # v5e has no bf16 vector/EUP datapath).
    x = x_ref[...].astype(jnp.float32)

    # Linear / zero region (matches torch.where(x > 0, x, 0), incl. NaN -> 0).
    y_lin = jnp.where(x > 0, x, 0.0)

    # Rolled-off region.  Clamping to [a, cutoff] bounds log() to [0, pi/2];
    # sin is flat at pi/2 (sin(pi/2)=1), so the saturated branch y = 2a falls
    # out of the same expression to within f32 roundoff and no separate
    # x >= cutoff select is needed.
    x_c = jnp.minimum(jnp.maximum(x, a), cutoff)
    roll = a * jnp.sin(jnp.log(x_c * inv_a)) + a

    o_ref[...] = jnp.where(x >= a, roll, y_lin).astype(o_ref.dtype)


def aarelu(x, alpha):
    """Apply AAReLU elementwise. x: any shape (e.g. NCHW), alpha: scalar."""
    orig_shape = x.shape
    dtype = x.dtype
    total = x.size
    itemsize = jnp.dtype(dtype).itemsize
    sub = max(8, 32 // itemsize)         # sublane granularity for this dtype

    # ---- copy-free lane-dense 2-D collapse when possible --------------------
    lanes = None
    for cand in range(_LANES_MAX, 127, -128):
        if total % cand == 0:
            lanes = cand
            break

    needs_pad = lanes is None
    if needs_pad:
        # No multiple-of-128 factorization: flatten + pad to one lane width.
        lanes = _LANES_MAX
        padded_total = _round_up(total, lanes)
        x2 = jnp.pad(x.reshape(-1), (0, padded_total - total)).reshape(-1, lanes)
    else:
        x2 = x.reshape(total // lanes, lanes)   # free reshape, no extra HBM traffic
    rows = x2.shape[0]

    # ---- row tile: ~4 MiB f32 blocks, >=2 grid steps when possible ----------
    tile_cap = max(sub, (_TARGET_BLOCK_ELEMS // lanes) // sub * sub)
    if rows <= sub:
        tile_r = rows                    # single block equal to the full dim
    else:
        half = _round_up(pl.cdiv(rows, 2), sub)  # >=2 steps -> v7x megacore split
        tile_r = max(sub, min(tile_cap, half))
    grid = (pl.cdiv(rows, tile_r),)      # last block may be partial (masked store)

    alpha_arr = jnp.asarray(alpha, dtype=jnp.float32).reshape(1, 1)

    extra = {}
    if needs_pad:
        # x2 is a fresh temporary -> safe to reuse its HBM slab for the output.
        extra["input_output_aliases"] = {1: 0}

    out2 = pl.pallas_call(
        _aarelu_kernel,
        out_shape=jax.ShapeDtypeStruct(x2.shape, dtype),
        grid=grid,
        in_specs=[
            pl.BlockSpec(memory_space=pltpu.MemorySpace.SMEM),   # alpha scalar
            pl.BlockSpec((tile_r, lanes), lambda i: (i, 0)),     # tiled input
        ],
        out_specs=pl.BlockSpec((tile_r, lanes), lambda i: (i, 0)),
        compiler_params=pltpu.CompilerParams(
            dimension_semantics=("parallel",),        # megacore split on v7x
            vmem_limit_bytes=32 * 1024 * 1024,        # 4 MiB blocks fit on v5e too
        ),
        cost_estimate=pl.CostEstimate(
            flops=10 * total,
            transcendentals=2 * total,
            bytes_accessed=2 * total * itemsize,
        ),
        **extra,
    )(alpha_arr, x2)

    if needs_pad:
        return out2.reshape(-1)[:total].reshape(orig_shape)
    return out2.reshape(orig_shape)


def _aarelu_ref(x, alpha):
    """Pure-JAX reference mirroring the PyTorch forward."""
    a = jnp.maximum(jnp.asarray(alpha, jnp.float32), 1e-6)
    cutoff = a * _EXP_HALF_PI
    xf = x.astype(jnp.float32)
    y = jnp.where(xf > 0, xf, jnp.zeros_like(xf))
    x_safe = jnp.where(xf < a, a, xf)
    roll_val = a * jnp.sin(jnp.log(x_safe / a)) + a
    y = jnp.where(xf >= a, roll_val, y)
    y = jnp.where(xf >= cutoff, 2.0 * a, y)
    return y.astype(x.dtype)


if __name__ == "__main__":
    init_alpha = 6.0  # deterministic parameter init, as in the module __init__

    def check(x, name):
        out = jax.block_until_ready(aarelu(x, init_alpha))
        ref = _aarelu_ref(x, init_alpha)
        assert out.shape == x.shape and out.dtype == x.dtype, name
        assert jnp.allclose(out, ref, atol=1e-5, rtol=1e-5), f"mismatch: {name}"

    # NCHW conv-activation-like input; scaled so all AAReLU regions
    # (negative / linear / rolled-off / saturated) are exercised.
    check(jax.random.normal(jax.random.PRNGKey(0), (2, 4, 16, 16),
                            dtype=jnp.float32) * 20.0, "nchw")

    # Odd size (no multiple-of-128 factorization) -> pad/slice fallback path.
    check(jax.random.normal(jax.random.PRNGKey(1), (3, 5, 7, 11),
                            dtype=jnp.float32) * 20.0, "odd")

    # Multi-step grid with a partial (masked) last row block.
    check(jax.random.normal(jax.random.PRNGKey(2), (2, 4, 160, 16),
                            dtype=jnp.float32) * 20.0, "partial-block")

    print("KERNEL_OK")
</pallas_src>

<mosaic_0001>
module attributes {stable_mosaic.version = 11 : i64} {
  func.func @_aarelu_kernel(%arg0: i32, %arg1: memref<1x1xf32, #tpu.memory_space<smem>>, %arg2: memref<2x1024xf32, #tpu.memory_space<vmem>>, %arg3: memref<2x1024xf32, #tpu.memory_space<vmem>>) attributes {dimension_semantics = [#tpu.dimension_semantics<parallel>], iteration_bounds = array<i64: 1>, scalar_prefetch = 0 : i64, scratch_operands = 0 : i64, tpu.core_type = #tpu.core_type<tc>, window_params = [{transform_indices = @transform_0, window_bounds = array<i64: 1, 1>}, {transform_indices = @transform_1, window_bounds = array<i64: 2, 1024>}, {transform_indices = @transform_2, window_bounds = array<i64: 2, 1024>}]} {
    %c0 = arith.constant 0 : index
    %c0_0 = arith.constant 0 : index
    %0 = memref.load %arg1[%c0, %c0_0] : memref<1x1xf32, #tpu.memory_space<smem>>
    %cst = arith.constant 9.99999997E-7 : f32
    %1 = arith.maximumf %0, %cst : f32
    %cst_1 = arith.constant 1.000000e+00 : f32
    %2 = arith.divf %cst_1, %1 : f32
    %cst_2 = arith.constant 4.81047726 : f32
    %3 = arith.mulf %1, %cst_2 : f32
    %c0_3 = arith.constant 0 : index
    %c0_4 = arith.constant 0 : index
    %4 = vector.load %arg2[%c0_3, %c0_4] : memref<2x1024xf32, #tpu.memory_space<vmem>>, vector<2x1024xf32>
    %cst_5 = arith.constant 0.000000e+00 : f32
    %5 = vector.broadcast %cst_5 : f32 to vector<2x1024xf32>
    %6 = arith.cmpf ogt, %4, %5 : vector<2x1024xf32>
    %cst_6 = arith.constant 0.000000e+00 : f32
    %7 = vector.broadcast %cst_6 : f32 to vector<2x1024xf32>
    %8 = arith.select %6, %4, %7 : vector<2x1024xi1>, vector<2x1024xf32>
    %9 = vector.broadcast %1 : f32 to vector<2x1024xf32>
    %10 = arith.maximumf %4, %9 : vector<2x1024xf32>
    %11 = vector.broadcast %3 : f32 to vector<2x1024xf32>
    %12 = arith.minimumf %10, %11 : vector<2x1024xf32>
    %13 = vector.broadcast %2 : f32 to vector<2x1024xf32>
    %14 = arith.mulf %12, %13 : vector<2x1024xf32>
    %15 = math.log %14 : vector<2x1024xf32>
    %16 = math.sin %15 : vector<2x1024xf32>
    %17 = vector.broadcast %1 : f32 to vector<2x1024xf32>
    %18 = arith.mulf %17, %16 : vector<2x1024xf32>
    %19 = vector.broadcast %1 : f32 to vector<2x1024xf32>
    %20 = arith.addf %18, %19 : vector<2x1024xf32>
    %21 = vector.broadcast %1 : f32 to vector<2x1024xf32>
    %22 = arith.cmpf oge, %4, %21 : vector<2x1024xf32>
    %23 = arith.select %22, %20, %8 : vector<2x1024xi1>, vector<2x1024xf32>
    %c0_7 = arith.constant 0 : index
    %c0_8 = arith.constant 0 : index
    %24 = vector.load %arg3[%c0_7, %c0_8] : memref<2x1024xf32, #tpu.memory_space<vmem>>, vector<2x1024xf32>
    tpu.vector_store %arg3[%c0_7, %c0_8], %23 {strides = array<i32>} : memref<2x1024xf32, #tpu.memory_space<vmem>>, vector<2x1024xf32>,
    return
  }
  func.func @transform_0(%arg0: i32) -> (i32, i32) {
    %c0_i32 = arith.constant 0 : i32
    %c0_i32_0 = arith.constant 0 : i32
    %c0_i32_1 = arith.constant 0 : i32
    return %c0_i32, %c0_i32_0 : i32, i32
  }
  func.func @transform_1(%arg0: i32) -> (i32, i32) {
    %c0_i32 = arith.constant 0 : i32
    %c0_i32_0 = arith.constant 0 : i32
    return %arg0, %c0_i32 : i32, i32
  }
  func.func @transform_2(%arg0: i32) -> (i32, i32) {
    %c0_i32 = arith.constant 0 : i32
    %c0_i32_0 = arith.constant 0 : i32
    return %arg0, %c0_i32 : i32, i32
  }
}

</mosaic_0001>

<llo_original>
// kernel: tpu_custom_call.1
$region0: #{tpu_custom_call.1}
  #allocation0 [shape = 'u32[]', space=smem, size = 0x4, offset = 0x4, fixed_abs, tag = 'smem constant byte address 0x4 - core index']
  #allocation1 [shape = 'u32[72,128]{1,0:T(1,128)}', space=vmem, size = 0x9000, scoped, tag = 'internal scratch']
  #allocation2 [shape = 'f32[1,1]{1,0:T(1,128)S(6)}', space=smem, size = 0x200, scoped, tag = 'scoped memory for tpu_custom_call.1']
  %s0 = inlined_call_operand.<no memory space> [shape: f32[1,1], index: 0, kind: input, shape index: {}]
  %s1 = inlined_call_operand.hbm [shape: f32[2,1024], index: 1, kind: input, shape index: {}]
  %s2 = inlined_call_operand.hbm [shape: f32[2,1024], index: 2, kind: output, shape index: {}]
  %s3 = sld [smem:[#allocation0]]
  $region22: #{tpu_custom_call.1} parent=0
    _
  %s5 = ssub.s32 1, %s3
  %s6 = scalar_select 0, %s5, %s3
  %7 = sst [smem:[#allocation2]] %s0
  $region1: #{tpu_custom_call.1} parent=0
    #allocation3 [shape = 'u8[8192]{0}', space=vmem, size = 0x2000, scoped, tag = 'input window, operand 1, single buffered']
    #allocation4 [shape = 's32[1]{0}', space=sflag, size = 0x4, scoped, tag = 'scoped memory for tpu_custom_call.1']
    #allocation5 [shape = 's32[1]{0}', space=sflag, size = 0x4, scoped, tag = 'scoped memory for tpu_custom_call.1']
    #allocation6 [shape = 'u8[8192]{0}', space=vmem, size = 0x2000, scoped, tag = 'output window, operand 0, single buffered']
    %8 = vsyncpa [#allocation4], 0
    %9 = vsyncpa [#allocation5], 0
    // Predicated region
    $region2: #{tpu_custom_call.1} parent=1 // pred_check
      _
    $region3: #{tpu_custom_call.1} parent=1 // pred_check_branch
      %11 = sbr.rel (0) target = $region5
    $region4: #{tpu_custom_call.1} parent=1 // pred_region
      _
    $region5: #{tpu_custom_call.1} parent=1 // pred_fallthru
      _
    // Predicated region
    $region6: #{tpu_custom_call.1} parent=1 // pred_check
      _
    $region7: #{tpu_custom_call.1} parent=1 // pred_check_branch
      %13 = sbr.rel (0) target = $region9
    $region8: #{tpu_custom_call.1} parent=1 // pred_region
      %15 = vsyncadd [#allocation4], 0
      %s17 = sshll.u32 %s1, 4
      %s18 = int_to_ptr.hbm [resolvable:$true] %s17
      %s19 = sshll.u32 [#allocation3], 4
      %s20 = int_to_ptr.vmem [resolvable:$true] %s19
      %22 = dma.hbm_to_vmem [thread:$0]  %s18, 256, %s20, [#allocation4]
    $region9: #{tpu_custom_call.1} parent=1 // pred_fallthru
      _
    // Predicated region
    $region10: #{tpu_custom_call.1} parent=1 // pred_check
      _
    $region11: #{tpu_custom_call.1} parent=1 // pred_check_branch
      %24 = sbr.rel (0) target = $region13
    $region12: #{tpu_custom_call.1} parent=1 // pred_region
      %26 = dma.done [#allocation4], 256
    $region13: #{tpu_custom_call.1} parent=1 // pred_fallthru
      _
    %s27 = sld [smem:[#allocation2]]
    %s28 = smax.f32 %s27, 1e-06
    %v29 = vstv %s28
    %v30 = vrcp.pop %v29
    %v31 = vmul.f32 %v29, %v30
    %v32 = vsub.f32 1.0, %v31
    %v33 = vmul.f32 %v30, %v32
    %v34 = vadd.f32 %v30, %v33
    %vm35 = vweird.f32 %v29
    %vm36 = vweird.f32 %v30
    %vm37 = vmor %vm35, %vm36
    %v38 = vsel %vm37, %v30, %v34
    %v39 = vand.u32 2147483647, %v29
    %vm40 = vcmp.eq.f32.partialorder %v39, 8.507059e+37
    %v41 = vand.u32 %v29, 2147483648
    %v42 = vor.u32 1.1754944e-38, %v41
    %v43 = vsel %vm40, %v42, %v38
    %s44 = vtos %v43
    %s45 = smul.f32 %s28, 4.8104773
    %v46 = vld [vmem:[#allocation3] sm:$0xff]
    %v47 = vld [vmem:[#allocation3 + $0x8] sm:$0xff]
    %vm48 = vcmp.gt.f32.partialorder %v46, 0.0
    %vm49 = vcmp.gt.f32.partialorder %v47, 0.0
    %v50 = vsel %vm48, %v46, 0.0
    %v51 = vsel %vm49, %v47, 0.0
    %v52 = vstv %s28
    %v53 = vmax.f32 %v46, %v52
    %v54 = vmax.f32 %v47, %v52
    %v55 = vstv %s45
    %v56 = vmin.f32 %v53, %v55
    %v57 = vmin.f32 %v54, %v55
    %v58 = vstv %s44
    %v59 = vmul.f32 %v56, %v58
    %v60 = vmul.f32 %v57, %v58
    %v61 = vlog2.pop %v59
    %v62 = vmul.f32 %v61, 0.6931472
    %v63 = vlog2.pop %v60
    %v64 = vmul.f32 %v63, 0.6931472
    %v65 = vand.u32 2147483647, %v62
    %vm66 = vcmp.le.f32.partialorder %v65, 0.7853982
    %vm67 = vcmp.lt.s32.totalorder %v62, 0
    %v68 = vand.u32 %v62, 2139095040
    %v69 = vshrl.u32 %v68, 23
    %v70 = vsub.s32 %v69, 127
    %v71 = vand.u32 2147483647, %v62
    %v72 = vand.u32 %v71, 8388607
    %v73 = vor.u32 %v72, 8388608
    %v74 = vsub.s32 0, %v73
    %v75 = vadd.s32 %v70, 1
    %vm76 = vcmp.gt.s32.totalorder %v75, 0
    %v77 = vsel %vm76, %v75, 0
    %v78 = vshrl.u32 %v77, 5
    %v79 = vand.u32 %v77, 31
    %v80 = vsub.s32 32, %v79
    %v81 = vshrl.u32 683565275, %v80
    %v82 = vshll.u32 683565275, %v79
    %v83 = vshrl.u32 2475754826, %v80
    %v84 = vor.u32 %v82, %v83
    %v85 = vshll.u32 2475754826, %v79
    %v86 = vshrl.u32 2131351028, %v80
    %v87 = vor.u32 %v85, %v86
    %v88 = vshll.u32 2131351028, %v79
    %v89 = vshrl.u32 2102212464, %v80
    %v90 = vor.u32 %v88, %v89
    %v91 = vshll.u32 2102212464, %v79
    %v92 = vshrl.u32 920167782, %v80
    %v93 = vor.u32 %v91, %v92
    %v94 = vshll.u32 920167782, %v79
    %v95 = vshrl.u32 1326507024, %v80
    %v96 = vor.u32 %v94, %v95
    %vm97 = vcmp.lt.s32.totalorder %v78, 1
    %vm98 = vcmp.lt.s32.totalorder %v78, 2
    %vm99 = vcmp.lt.s32.totalorder %v78, 3
    %vm100 = vcmp.lt.s32.totalorder %v78, 4
    %v101 = vsel %vm97, %v81, %v84
    %v102 = vsel %vm100, %v90, 2102212464
    %v103 = vsel %vm99, %v87, %v102
    %v104 = vsel %vm98, %v101, %v103
    %v105 = vsel %vm97, %v84, %v87
    %v106 = vsel %vm100, %v93, 920167782
    %v107 = vsel %vm99, %v90, %v106
    %v108 = vsel %vm98, %v105, %v107
    %v109 = vsel %vm97, %v87, %v90
    %v110 = vsel %vm100, %v96, 1326507024
    %v111 = vsel %vm99, %v93, %v110
    %v112 = vsel %vm98, %v109, %v111
    %v113 = vshll.u32 %v73, 8
    %v114 = vand.u32 %v113, 65535
    %v115 = vshrl.u32 %v113, 16
    %v116 = vand.u32 %v112, 65535
    %v117 = vshrl.u32 %v112, 16
    %v118 = vmul.u32 %v114, %v116
    %v119 = vmul.u32 %v114, %v117
    %v120 = vmul.u32 %v115, %v116
    %v121 = vmul.u32 %v115, %v117
    %v122 = vshll.u32 %v119, 16
    %v123 = vshrl.u32 %v119, 16
    %v124 = vshll.u32 %v120, 16
    %v125 = vshrl.u32 %v120, 16
    %vm126 = vc.u32 %v118, %v122
    %v127 = vsel %vm126, 1, 0
    %v128 = vadd.s32 %v118, %v122
    %v129 = vadd.s32 %v121, %v127
    %vm130 = vc.u32 %v128, %v124
    %v131 = vsel %vm130, 1, 0
    %v132 = vadd.s32 %v128, %v124
    %v133 = vadd.s32 %v129, %v131
    %v134 = vadd.s32 %v133, %v123
    %v135 = vadd.s32 %v134, %v125
    %v136 = vand.u32 %v113, 65535
    %v137 = vshrl.u32 %v113, 16
    %v138 = vand.u32 %v108, 65535
    %v139 = vshrl.u32 %v108, 16
    %v140 = vmul.u32 %v136, %v138
    %v141 = vmul.u32 %v136, %v139
    %v142 = vmul.u32 %v137, %v138
    %v143 = vmul.u32 %v137, %v139
    %v144 = vshll.u32 %v141, 16
    %v145 = vshrl.u32 %v141, 16
    %v146 = vshll.u32 %v142, 16
    %v147 = vshrl.u32 %v142, 16
    %vm148 = vc.u32 %v140, %v144
    %v149 = vsel %vm148, 1, 0
    %v150 = vadd.s32 %v140, %v144
    %v151 = vadd.s32 %v143, %v149
    %vm152 = vc.u32 %v150, %v146
    %v153 = vsel %vm152, 1, 0
    %v154 = vadd.s32 %v150, %v146
    %v155 = vadd.s32 %v151, %v153
    %v156 = vadd.s32 %v155, %v145
    %v157 = vadd.s32 %v156, %v147
    %v158 = vmul.u32 %v113, %v104
    %v159 = vadd.s32 %v135, %v154
    %vm160 = vc.u32 %v135, %v154
    %v161 = vadd.s32 %v157, 1
    %v162 = vsel %vm160, %v161, %v157
    %v163 = vadd.s32 %v158, %v162
    %v164 = vadd.s32 %v163, 536870912
    %v165 = vshrl.u32 %v164, 30
    %v166 = vshll.u32 %v165, 30
    %v167 = vsub.s32 %v163, %v166
    %vm168 = vcmp.lt.s32.totalorder %v167, 0
    %v169 = vsub.s32 0, %v167
    %v170 = vsel %vm168, %v169, %v167
    %v171 = vclz %v170
    %v172 = vsub.s32 %v171, 2
    %vm173 = vcmp.gt.s32.totalorder 0, %v172
    %v174 = vsel %vm173, 0, %v172
    %v175 = vsub.s32 32, %v174
    %v176 = vshll.u32 %v167, %v174
    %v177 = vshrl.u32 %v159, %v175
    %v178 = vor.u32 %v176, %v177
    %v179 = vsub.s32 4294967266, %v174
    %v180 = vadd.s32 %v179, 127
    %v181 = vshll.u32 %v180, 23
    %v182 = vor.u32 4788187, %v181
    %v183 = vand.u32 2147483647, %v182
    %v185 = vcvt.s32.f32 %v178
    %v186 = vmul.f32 %v185, %v183
    %v187 = vxor.u32 %v186, 2147483648
    %v188 = vsel %vm67, %v187, %v186
    %v189 = vsub.s32 4, %v165
    %v190 = vsel %vm67, %v189, %v165
    %v191 = vsel %vm66, %v62, %v188
    %v192 = vsel %vm66, 0, %v190
    %v193 = vmul.f32 %v191, %v191
    %v194 = vmul.f32 %v193, -0.001358992
    %v195 = vadd.f32 %v194, 0.041655596
    %v196 = vmul.f32 %v193, %v195
    %v197 = vadd.f32 %v196, -0.4999988
    %v198 = vmul.f32 %v193, %v197
    %v199 = vadd.f32 1.0, %v198
    %v200 = vmul.f32 %v191, %v191
    %v201 = vmul.f32 %v200, -0.00019511016
    %v202 = vadd.f32 %v201, 0.008332121
    %v203 = vmul.f32 %v200, %v202
    %v204 = vadd.f32 %v203, -0.16666654
    %v205 = vmul.f32 %v200, %v204
    %v206 = vadd.f32 %v205, 1.0
    %v207 = vmul.f32 %v206, %v191
    %vm208 = vweird.f32 %v62
    %v209 = vadd.s32 %v192, 3
    %v210 = vand.u32 %v209, 3
    %vm211 = vcmp.lt.s32.totalorder %v210, 2
    %vm212 = vcmp.eq.s32.totalorder %v210, 0
    %v213 = vxor.u32 %v207, 2147483648
    %v214 = vsel %vm212, %v199, %v213
    %vm215 = vcmp.eq.s32.totalorder %v210, 2
    %v216 = vxor.u32 %v199, 2147483648
    %v217 = vsel %vm215, %v216, %v207
    %v218 = vsel %vm211, %v214, %v217
    %v219 = vsel %vm208, nan, %v218
    %v220 = vand.u32 2147483647, %v64
    %vm221 = vcmp.le.f32.partialorder %v220, 0.7853982
    %vm222 = vcmp.lt.s32.totalorder %v64, 0
    %v223 = vand.u32 %v64, 2139095040
    %v224 = vshrl.u32 %v223, 23
    %v225 = vsub.s32 %v224, 127
    %v226 = vand.u32 2147483647, %v64
    %v227 = vand.u32 %v226, 8388607
    %v228 = vor.u32 %v227, 8388608
    %v229 = vsub.s32 0, %v228
    %v230 = vadd.s32 %v225, 1
    %vm231 = vcmp.gt.s32.totalorder %v230, 0
    %v232 = vsel %vm231, %v230, 0
    %v233 = vshrl.u32 %v232, 5
    %v234 = vand.u32 %v232, 31
    %v235 = vsub.s32 32, %v234
    %v236 = vshrl.u32 683565275, %v235
    %v237 = vshll.u32 683565275, %v234
    %v238 = vshrl.u32 2475754826, %v235
    %v239 = vor.u32 %v237, %v238
    %v240 = vshll.u32 2475754826, %v234
    %v241 = vshrl.u32 2131351028, %v235
    %v242 = vor.u32 %v240, %v241
    %v243 = vshll.u32 2131351028, %v234
    %v244 = vshrl.u32 2102212464, %v235
    %v245 = vor.u32 %v243, %v244
    %v246 = vshll.u32 2102212464, %v234
    %v247 = vshrl.u32 920167782, %v235
    %v248 = vor.u32 %v246, %v247
    %v249 = vshll.u32 920167782, %v234
    %v250 = vshrl.u32 1326507024, %v235
    %v251 = vor.u32 %v249, %v250
    %vm252 = vcmp.lt.s32.totalorder %v233, 1
    %vm253 = vcmp.lt.s32.totalorder %v233, 2
    %vm254 = vcmp.lt.s32.totalorder %v233, 3
    %vm255 = vcmp.lt.s32.totalorder %v233, 4
    %v256 = vsel %vm252, %v236, %v239
    %v257 = vsel %vm255, %v245, 2102212464
    %v258 = vsel %vm254, %v242, %v257
    %v259 = vsel %vm253, %v256, %v258
    %v260 = vsel %vm252, %v239, %v242
    %v261 = vsel %vm255, %v248, 920167782
    %v262 = vsel %vm254, %v245, %v261
    %v263 = vsel %vm253, %v260, %v262
    %v264 = vsel %vm252, %v242, %v245
    %v265 = vsel %vm255, %v251, 1326507024
    %v266 = vsel %vm254, %v248, %v265
    %v267 = vsel %vm253, %v264, %v266
    %v268 = vshll.u32 %v228, 8
    %v269 = vand.u32 %v268, 65535
    %v270 = vshrl.u32 %v268, 16
    %v271 = vand.u32 %v267, 65535
    %v272 = vshrl.u32 %v267, 16
    %v273 = vmul.u32 %v269, %v271
    %v274 = vmul.u32 %v269, %v272
    %v275 = vmul.u32 %v270, %v271
    %v276 = vmul.u32 %v270, %v272
    %v277 = vshll.u32 %v274, 16
    %v278 = vshrl.u32 %v274, 16
    %v279 = vshll.u32 %v275, 16
    %v280 = vshrl.u32 %v275, 16
    %vm281 = vc.u32 %v273, %v277
    %v282 = vsel %vm281, 1, 0
    %v283 = vadd.s32 %v273, %v277
    %v284 = vadd.s32 %v276, %v282
    %vm285 = vc.u32 %v283, %v279
    %v286 = vsel %vm285, 1, 0
    %v287 = vadd.s32 %v283, %v279
    %v288 = vadd.s32 %v284, %v286
    %v289 = vadd.s32 %v288, %v278
    %v290 = vadd.s32 %v289, %v280
    %v291 = vand.u32 %v268, 65535
    %v292 = vshrl.u32 %v268, 16
    %v293 = vand.u32 %v263, 65535
    %v294 = vshrl.u32 %v263, 16
    %v295 = vmul.u32 %v291, %v293
    %v296 = vmul.u32 %v291, %v294
    %v297 = vmul.u32 %v292, %v293
    %v298 = vmul.u32 %v292, %v294
    %v299 = vshll.u32 %v296, 16
    %v300 = vshrl.u32 %v296, 16
    %v301 = vshll.u32 %v297, 16
    %v302 = vshrl.u32 %v297, 16
    %vm303 = vc.u32 %v295, %v299
    %v304 = vsel %vm303, 1, 0
    %v305 = vadd.s32 %v295, %v299
    %v306 = vadd.s32 %v298, %v304
    %vm307 = vc.u32 %v305, %v301
    %v308 = vsel %vm307, 1, 0
    %v309 = vadd.s32 %v305, %v301
    %v310 = vadd.s32 %v306, %v308
    %v311 = vadd.s32 %v310, %v300
    %v312 = vadd.s32 %v311, %v302
    %v313 = vmul.u32 %v268, %v259
    %v314 = vadd.s32 %v290, %v309
    %vm315 = vc.u32 %v290, %v309
    %v316 = vadd.s32 %v312, 1
    %v317 = vsel %vm315, %v316, %v312
    %v318 = vadd.s32 %v313, %v317
    %v319 = vadd.s32 %v318, 536870912
    %v320 = vshrl.u32 %v319, 30
    %v321 = vshll.u32 %v320, 30
    %v322 = vsub.s32 %v318, %v321
    %vm323 = vcmp.lt.s32.totalorder %v322, 0
    %v324 = vsub.s32 0, %v322
    %v325 = vsel %vm323, %v324, %v322
    %v326 = vclz %v325
    %v327 = vsub.s32 %v326, 2
    %vm328 = vcmp.gt.s32.totalorder 0, %v327
    %v329 = vsel %vm328, 0, %v327
    %v330 = vsub.s32 32, %v329
    %v331 = vshll.u32 %v322, %v329
    %v332 = vshrl.u32 %v314, %v330
    %v333 = vor.u32 %v331, %v332
    %v334 = vsub.s32 4294967266, %v329
    %v335 = vadd.s32 %v334, 127
    %v336 = vshll.u32 %v335, 23
    %v337 = vor.u32 4788187, %v336
    %v338 = vand.u32 2147483647, %v337
    %v340 = vcvt.s32.f32 %v333
    %v341 = vmul.f32 %v340, %v338
    %v342 = vxor.u32 %v341, 2147483648
    %v343 = vsel %vm222, %v342, %v341
    %v344 = vsub.s32 4, %v320
    %v345 = vsel %vm222, %v344, %v320
    %v346 = vsel %vm221, %v64, %v343
    %v347 = vsel %vm221, 0, %v345
    %v348 = vmul.f32 %v346, %v346
    %v349 = vmul.f32 %v348, -0.001358992
    %v350 = vadd.f32 %v349, 0.041655596
    %v351 = vmul.f32 %v348, %v350
    %v352 = vadd.f32 %v351, -0.4999988
    %v353 = vmul.f32 %v348, %v352
    %v354 = vadd.f32 1.0, %v353
    %v355 = vmul.f32 %v346, %v346
    %v356 = vmul.f32 %v355, -0.00019511016
    %v357 = vadd.f32 %v356, 0.008332121
    %v358 = vmul.f32 %v355, %v357
    %v359 = vadd.f32 %v358, -0.16666654
    %v360 = vmul.f32 %v355, %v359
    %v361 = vadd.f32 %v360, 1.0
    %v362 = vmul.f32 %v361, %v346
    %vm363 = vweird.f32 %v64
    %v364 = vadd.s32 %v347, 3
    %v365 = vand.u32 %v364, 3
    %vm366 = vcmp.lt.s32.totalorder %v365, 2
    %vm367 = vcmp.eq.s32.totalorder %v365, 0
    %v368 = vxor.u32 %v362, 2147483648
    %v369 = vsel %vm367, %v354, %v368
    %vm370 = vcmp.eq.s32.totalorder %v365, 2
    %v371 = vxor.u32 %v354, 2147483648
    %v372 = vsel %vm370, %v371, %v362
    %v373 = vsel %vm366, %v369, %v372
    %v374 = vsel %vm363, nan, %v373
    %v375 = vmul.f32 %v52, %v219
    %v376 = vmul.f32 %v52, %v374
    %v377 = vadd.f32 %v375, %v52
    %v378 = vadd.f32 %v376, %v52
    %vm379 = vcmp.ge.f32.partialorder %v46, %v52
    %vm380 = vcmp.ge.f32.partialorder %v47, %v52
    %v381 = vsel %vm379, %v377, %v50
    %v382 = vsel %vm380, %v378, %v51
    %383 = vst [vmem:[#allocation6] sm:$0xff] %v381
    %384 = vst [vmem:[#allocation6 + $0x8] sm:$0xff] %v382
    // Predicated region
    $region14: #{tpu_custom_call.1} parent=1 // pred_check
      _
    $region15: #{tpu_custom_call.1} parent=1 // pred_check_branch
      %386 = sbr.rel (0) target = $region17
    $region16: #{tpu_custom_call.1} parent=1 // pred_region
      %388 = vsyncadd [#allocation5], 0
      %s390 = sshll.u32 [#allocation6], 4
      %s391 = int_to_ptr.vmem [resolvable:$true] %s390
      %s392 = sshll.u32 %s2, 4
      %s393 = int_to_ptr.hbm [resolvable:$true] %s392
      %395 = dma.vmem_to_hbm [thread:$0]  %s391, 256, %s393, [#allocation5]
    $region17: #{tpu_custom_call.1} parent=1 // pred_fallthru
      _
    // Predicated region
    $region18: #{tpu_custom_call.1} parent=1 // pred_check
      _
    $region19: #{tpu_custom_call.1} parent=1 // pred_check_branch
      %397 = sbr.rel (0) target = $region21
    $region20: #{tpu_custom_call.1} parent=1 // pred_region
      %399 = dma.done [#allocation5], 256
    $region21: #{tpu_custom_call.1} parent=1 // pred_fallthru
      _
    %400 = vsyncpa [#allocation4], 1
    %401 = vsyncpa [#allocation5], 1

</llo_original>
